<compile_context>
chip_gen: v7x
topology: tpu7x:2x2x1
jax: 0.10.0
libtpu: 0.0.40
codegen_flags: <defaults>
</compile_context>

<pallas_src>
import math

import jax
import jax.numpy as jnp
from jax.experimental import pallas as pl
from jax.experimental.pallas import tpu as pltpu


def _round_up(x, m):
    return ((x + m - 1) // m) * m


def _make_linear_kernel(has_bias, use_scratch, mxu_dtype):
    """Build the fused matmul(+bias) kernel body.

    Grid = (M tiles, N tiles, K tiles); K is last ("arbitrary") and is reduced
    either directly into the resident output block (f32 outputs) or into a
    f32 VMEM scratch accumulator (narrow output dtypes).
    """

    def kernel(*refs):
        if use_scratch:
            acc_ref = refs[-1]
            refs = refs[:-1]
        if has_bias:
            x_ref, w_ref, b_ref, out_ref = refs
        else:
            x_ref, w_ref, out_ref = refs

        k = pl.program_id(2)

        x_tile = x_ref[...]
        w_tile = w_ref[...]
        if mxu_dtype is not None:
            x_tile = x_tile.astype(mxu_dtype)
            w_tile = w_tile.astype(mxu_dtype)  # no-op if already cast in the wrapper
        partial = jnp.dot(x_tile, w_tile, preferred_element_type=jnp.float32)

        if use_scratch:
            @pl.when(k == 0)
            def _init():
                acc_ref[...] = jnp.zeros_like(acc_ref)

            acc_ref[...] += partial

            @pl.when(k == pl.num_programs(2) - 1)
            def _finalize():
                res = acc_ref[...]
                if has_bias:
                    res = res + b_ref[...].astype(jnp.float32)
                out_ref[...] = res.astype(out_ref.dtype)
        else:
            # f32 output: accumulate straight into the resident output block
            # (saves tm*tn*4 B of VMEM and a full-tile copy per output block).
            @pl.when(k == 0)
            def _init():
                if has_bias:
                    out_ref[...] = jnp.broadcast_to(
                        b_ref[...].astype(out_ref.dtype), out_ref.shape)
                else:
                    out_ref[...] = jnp.zeros_like(out_ref)

            out_ref[...] += partial

    return kernel


def simple_linear_forward(x, weight, bias=None, *,
                          tm=512, tn=512, tk=1024,
                          mxu_dtype=None, w_buffers=2):
    """Pallas implementation of SimpleLinear.forward. Returns {'logits': ...}."""
    B, D = x.shape
    OUT, D2 = weight.shape
    assert D == D2, "in_features mismatch between x and weight"

    out_dtype = x.dtype
    # f32 outputs can be accumulated in place; narrower outputs need a f32 scratch.
    use_scratch = jnp.dtype(out_dtype) != jnp.dtype(jnp.float32)

    LANE = 128
    align_m = 8 if jnp.dtype(out_dtype).itemsize >= 4 else 16

    # Tile sizes (clamped to the padded array extents; tn/tk stay 128-aligned,
    # defaults are 256-multiples to feed the 256-wide MXU on v6e/v7x).
    tm = min(tm, _round_up(B, align_m))
    tn = min(tn, _round_up(OUT, LANE))
    tk = min(tk, _round_up(D, LANE))

    Bp = _round_up(B, tm)
    OUTp = _round_up(OUT, tn)
    Dp = _round_up(D, tk)

    # v7x megacore: make sure the parallel (i, j) grid has >= 2 tiles when possible.
    if (Bp // tm) * (OUTp // tn) < 2 and tn >= 256 and tn % 256 == 0:
        tn //= 2

    grid = (Bp // tm, OUTp // tn, Dp // tk)

    # Pre-transpose the weight ONCE so the kernel is a plain (tm,tk)@(tk,tn)
    # contraction (no per-K-step transpose on the MXU feed path); optionally
    # cast to the MXU operand dtype so it streams from HBM at half the bytes.
    # TODO(synk): in a real model store the weight as (D, OUT) bf16 in HBM so
    # this transpose/cast does not cost an extra XLA pass per call.
    w_t = weight.T
    if mxu_dtype is not None:
        w_t = w_t.astype(mxu_dtype)

    # Zero-pad awkward shapes to tile multiples (correct for matmul: padded K
    # contributes 0, padded rows/cols are sliced off below).
    if (Bp, Dp) != (B, D):
        x = jnp.pad(x, ((0, Bp - B), (0, Dp - D)))
    if (Dp, OUTp) != (D, OUT):
        w_t = jnp.pad(w_t, ((0, Dp - D), (0, OUTp - OUT)))

    has_bias = bias is not None
    if has_bias:
        b2 = bias.astype(jnp.float32).reshape(1, OUT)
        if OUTp != OUT:
            b2 = jnp.pad(b2, ((0, 0), (0, OUTp - OUT)))

    x_spec = pl.BlockSpec((tm, tk), lambda i, j, k: (i, k))
    if w_buffers != 2:
        # Deeper buffering on the bandwidth-dominant operand (sweep if DMA waits show).
        w_spec = pl.BlockSpec((tk, tn), lambda i, j, k: (k, j),
                              pipeline_mode=pl.Buffered(w_buffers))
    else:
        w_spec = pl.BlockSpec((tk, tn), lambda i, j, k: (k, j))
    o_spec = pl.BlockSpec((tm, tn), lambda i, j, k: (i, j))

    in_specs = [x_spec, w_spec]
    args = [x, w_t]
    if has_bias:
        in_specs.append(pl.BlockSpec((1, tn), lambda i, j, k: (0, j)))
        args.append(b2)

    scratch = [pltpu.VMEM((tm, tn), jnp.float32)] if use_scratch else []

    # VMEM budget: double-buffered blocks + accumulator + headroom, capped at
    # 64 MiB so the request is also valid on v7x (64 MiB physical VMEM).
    x_it = jnp.dtype(x.dtype).itemsize
    w_it = jnp.dtype(w_t.dtype).itemsize
    o_it = jnp.dtype(out_dtype).itemsize
    footprint = (2 * tm * tk * x_it
                 + max(2, w_buffers) * tk * tn * w_it
                 + 2 * tm * tn * o_it
                 + (2 * tn * 4 if has_bias else 0)
                 + (tm * tn * 4 if use_scratch else 0))
    vmem_limit = int(min(max(footprint + (8 << 20), 32 << 20), 64 << 20))

    # Advisory cost: W blocks are re-streamed once per M tile, x once per N tile.
    gm, gn, _ = grid
    bytes_accessed = (gn * Bp * Dp * x_it
                      + gm * OUTp * Dp * w_it
                      + Bp * OUTp * o_it
                      + (gm * OUTp * 4 if has_bias else 0))
    cost = pl.CostEstimate(flops=2 * Bp * OUTp * Dp, transcendentals=0,
                           bytes_accessed=int(bytes_accessed))

    out = pl.pallas_call(
        _make_linear_kernel(has_bias, use_scratch, mxu_dtype),
        out_shape=jax.ShapeDtypeStruct((Bp, OUTp), out_dtype),
        grid_spec=pltpu.PrefetchScalarGridSpec(
            num_scalar_prefetch=0, grid=grid,
            in_specs=in_specs, out_specs=o_spec, scratch_shapes=scratch),
        compiler_params=pltpu.CompilerParams(
            dimension_semantics=("parallel", "parallel", "arbitrary"),
            vmem_limit_bytes=vmem_limit),
        cost_estimate=cost,
    )(*args)

    if (Bp, OUTp) != (B, OUT):
        out = out[:B, :OUT]
    return {"logits": out}


if __name__ == "__main__":
    in_features = 256
    out_features = 256
    B = 16

    key = jax.random.PRNGKey(0)
    kx, kw, kb, kx2, kw2 = jax.random.split(key, 5)

    # reset_parameters(): kaiming_uniform_(weight, nonlinearity='linear')
    #   -> bound = sqrt(3) / sqrt(fan_in)
    bound = math.sqrt(3.0) / math.sqrt(in_features)
    weight = jax.random.uniform(kw, (out_features, in_features),
                                dtype=jnp.float32, minval=-bound, maxval=bound)
    # (module inits bias to 0; a non-zero bias is used here so the bias path is
    #  actually verified numerically)
    bias = 0.1 * jax.random.normal(kb, (out_features,), dtype=jnp.float32)
    x = jax.random.normal(kx, (B, in_features), dtype=jnp.float32)

    ref = x @ weight.T + bias

    # 1) small tiles -> (2, 2, 2) grid: exercises K accumulation + bias init.
    out1 = jax.block_until_ready(
        simple_linear_forward(x, weight, bias, tm=8, tn=128, tk=128)["logits"])
    assert out1.shape == (B, out_features)
    assert jnp.allclose(out1, ref, atol=1e-4, rtol=1e-4), "small-tile f32 mismatch"

    # 2) default (large) tiles, f32 MXU operands, in-place output accumulation.
    out2 = jax.block_until_ready(simple_linear_forward(x, weight, bias)["logits"])
    assert jnp.allclose(out2, ref, atol=1e-4, rtol=1e-4), "default-tile f32 mismatch"

    # 3) bf16 MXU operands with f32 accumulation (~1e-3 relative error expected).
    out3 = jax.block_until_ready(
        simple_linear_forward(x, weight, bias, mxu_dtype=jnp.bfloat16)["logits"])
    assert jnp.allclose(out3, ref, atol=2e-2, rtol=2e-2), "bf16-MXU mismatch"

    # 4) awkward non-128-multiple shapes, no bias -> exercises zero-padding path.
    x2 = jax.random.normal(kx2, (10, 200), dtype=jnp.float32)
    w2 = jax.random.uniform(kw2, (300, 200), dtype=jnp.float32,
                            minval=-bound, maxval=bound)
    out4 = jax.block_until_ready(simple_linear_forward(x2, w2, None)["logits"])
    assert out4.shape == (10, 300)
    assert jnp.allclose(out4, x2 @ w2.T, atol=1e-4, rtol=1e-4), "padded/no-bias mismatch"

    # 5) bf16 in/out -> narrow output dtype takes the f32 scratch-accumulator path.
    out5 = jax.block_until_ready(
        simple_linear_forward(x.astype(jnp.bfloat16),
                              weight.astype(jnp.bfloat16),
                              bias.astype(jnp.bfloat16))["logits"])
    assert out5.dtype == jnp.bfloat16
    assert jnp.allclose(out5.astype(jnp.float32), ref, atol=3e-2, rtol=3e-2), \
        "bf16 in/out mismatch"

    print("KERNEL_OK")
</pallas_src>

<mosaic_0001>
module attributes {stable_mosaic.version = 11 : i64} {
  func.func @kernel(%arg0: i32, %arg1: i32, %arg2: i32, %arg3: memref<8x128xf32, #tpu.memory_space<vmem>>, %arg4: memref<128x128xf32, #tpu.memory_space<vmem>>, %arg5: memref<1x128xf32, #tpu.memory_space<vmem>>, %arg6: memref<8x128xf32, #tpu.memory_space<vmem>>) attributes {dimension_semantics = [#tpu.dimension_semantics<parallel>, #tpu.dimension_semantics<parallel>, #tpu.dimension_semantics<arbitrary>], iteration_bounds = array<i64: 2, 2, 2>, scalar_prefetch = 0 : i64, scratch_operands = 0 : i64, tpu.core_type = #tpu.core_type<tc>, window_params = [{transform_indices = @transform_0, window_bounds = array<i64: 8, 128>}, {transform_indices = @transform_1, window_bounds = array<i64: 128, 128>}, {transform_indices = @transform_2, window_bounds = array<i64: 1, 128>}, {transform_indices = @transform_3, window_bounds = array<i64: 8, 128>}]} {
    %c0 = arith.constant 0 : index
    %c0_0 = arith.constant 0 : index
    %0 = vector.load %arg3[%c0, %c0_0] : memref<8x128xf32, #tpu.memory_space<vmem>>, vector<8x128xf32>
    %c0_1 = arith.constant 0 : index
    %c0_2 = arith.constant 0 : index
    %1 = vector.load %arg4[%c0_1, %c0_2] : memref<128x128xf32, #tpu.memory_space<vmem>>, vector<128x128xf32>
    %cst = arith.constant dense<0.000000e+00> : vector<8x128xf32>
    %2 = tpu.matmul %0, %1, %cst {dimension_numbers = #tpu.dot_dimension_numbers<[1], [0], [0], [1], [0, 0, 1, 1], [], []>} : vector<8x128xf32>, vector<128x128xf32>, vector<8x128xf32> -> vector<8x128xf32>
    %c0_i32 = arith.constant 0 : i32
    %3 = arith.cmpi eq, %arg2, %c0_i32 : i32
    %4 = arith.extui %3 : i1 to i32
    %c0_i32_3 = arith.constant 0 : i32
    %5 = arith.cmpi ne, %4, %c0_i32_3 : i32
    scf.if %5 {
      %c0_8 = arith.constant 0 : index
      %c0_9 = arith.constant 0 : index
      %9 = vector.load %arg5[%c0_8, %c0_9] : memref<1x128xf32, #tpu.memory_space<vmem>>, vector<1x128xf32>
      %10 = vector.shape_cast %9 : vector<1x128xf32> to vector<1x128xf32>
      %11 = vector.broadcast %10 : vector<1x128xf32> to vector<8x128xf32>
      %c0_10 = arith.constant 0 : index
      %c0_11 = arith.constant 0 : index
      %12 = vector.load %arg6[%c0_10, %c0_11] : memref<8x128xf32, #tpu.memory_space<vmem>>, vector<8x128xf32>
      tpu.vector_store %arg6[%c0_10, %c0_11], %11 {strides = array<i32>} : memref<8x128xf32, #tpu.memory_space<vmem>>, vector<8x128xf32>,
    } else {
    }
    %c0_4 = arith.constant 0 : index
    %c0_5 = arith.constant 0 : index
    %6 = vector.load %arg6[%c0_4, %c0_5] : memref<8x128xf32, #tpu.memory_space<vmem>>, vector<8x128xf32>
    %7 = arith.addf %6, %2 : vector<8x128xf32>
    %c0_6 = arith.constant 0 : index
    %c0_7 = arith.constant 0 : index
    %8 = vector.load %arg6[%c0_6, %c0_7] : memref<8x128xf32, #tpu.memory_space<vmem>>, vector<8x128xf32>
    tpu.vector_store %arg6[%c0_6, %c0_7], %7 {strides = array<i32>} : memref<8x128xf32, #tpu.memory_space<vmem>>, vector<8x128xf32>,
    return
  }
  func.func @transform_0(%arg0: i32, %arg1: i32, %arg2: i32) -> (i32, i32) {
    %c0_i32 = arith.constant 0 : i32
    return %arg0, %arg2 : i32, i32
  }
  func.func @transform_1(%arg0: i32, %arg1: i32, %arg2: i32) -> (i32, i32) {
    %c0_i32 = arith.constant 0 : i32
    return %arg2, %arg1 : i32, i32
  }
  func.func @transform_2(%arg0: i32, %arg1: i32, %arg2: i32) -> (i32, i32) {
    %c0_i32 = arith.constant 0 : i32
    %c0_i32_0 = arith.constant 0 : i32
    return %c0_i32, %arg1 : i32, i32
  }
  func.func @transform_3(%arg0: i32, %arg1: i32, %arg2: i32) -> (i32, i32) {
    %c0_i32 = arith.constant 0 : i32
    return %arg0, %arg1 : i32, i32
  }
}

</mosaic_0001>

<llo_original>
// kernel: tpu_custom_call.1
$region0: #{tpu_custom_call.1}
  #allocation0 [shape = 'u32[]', space=smem, size = 0x4, offset = 0x4, fixed_abs, tag = 'smem constant byte address 0x4 - core index']
  #allocation1 [shape = 'u32[144,128]{1,0:T(1,128)}', space=vmem, size = 0x12000, scoped, tag = 'internal scratch']
  %s0 = inlined_call_operand.hbm [shape: f32[16,256], index: 0, kind: input, shape index: {}]
  %s1 = inlined_call_operand.hbm [shape: f32[256,256], index: 1, kind: input, shape index: {}]
  %s2 = inlined_call_operand.vmem [shape: f32[1,256], index: 2, kind: input, shape index: {}]
  %s3 = inlined_call_operand.hbm [shape: f32[16,256], index: 3, kind: output, shape index: {}]
  %s4 = sld [smem:[#allocation0]]
  $region57: #{tpu_custom_call.1} parent=0
    _
  %s6 = ssub.s32 1, %s4
  %s7 = scalar_select 0, %s6, %s4
  $region1: #{tpu_custom_call.1} parent=0
    #allocation2 [shape = 'u8[8192]{0}', space=vmem, size = 0x2000, scoped, tag = 'input window, operand 0']
    #allocation3 [shape = 's32[2]{0}', space=sflag, size = 0x8, scoped, tag = 'scoped memory for tpu_custom_call.1']
    #allocation4 [shape = 's32[2]{0}', space=sflag, size = 0x8, scoped, tag = 'scoped memory for tpu_custom_call.1']
    #allocation5 [shape = 'u8[131072]{0}', space=vmem, size = 0x20000, scoped, tag = 'input window, operand 1']
    #allocation6 [shape = 's32[2]{0}', space=sflag, size = 0x8, scoped, tag = 'scoped memory for tpu_custom_call.1']
    #allocation7 [shape = 'u8[8192]{0}', space=vmem, size = 0x2000, scoped, tag = 'output window, operand 0']
    %8 = vsyncpa [#allocation3], 0
    %s9 = scalar_lea.sflag [#allocation3], 1
    %10 = vsyncpa %s9, 0
    %11 = vsyncpa [#allocation6], 0
    %s12 = scalar_lea.sflag [#allocation6], 1
    %13 = vsyncpa %s12, 0
    %14 = vsyncpa [#allocation4], 0
    %s15 = scalar_lea.sflag [#allocation4], 1
    %16 = vsyncpa %s15, 0
    loop: start=0, step=1, limit=10
    $region2: #{tpu_custom_call.1} parent=1 // loop_pre_header
      _
    $region3: #{tpu_custom_call.1} parent=1 // loop_header
      %s18 = sphi 0, %s22
      %p19 = scmp.ge.s32.totalorder %s18, 10
      %s25 = sphi 0, %s44
      %s26 = sphi 0, %s40
      %s27 = sphi 0, %s36
      %s28 = sphi 0, %s25
      %s29 = sphi 0, %s26
      %s30 = sphi 0, %s27
      %s31 = sphi 0, %s28
      %s32 = sphi 0, %s29
      %s33 = sphi 0, %s30
      %s49 = sphi 0, %s51
      %s52 = sphi 0, %s49
      %s53 = sphi 0, %s52
      %s69 = sphi 0, %s53
      %s77 = sphi 0, %s79
      %s80 = sphi 0, %s77
      %s81 = sphi 0, %s80
      %s97 = sphi 0, %s81
      %s103 = sphi 0, %s105
      %s106 = sphi 0, %s103
      %s107 = sphi 0, %s106
      %s123 = sphi 0, %s107
      %s131 = sphi 0, %s133
      %s134 = sphi 0, %s131
      %s135 = sphi 0, %s134
      %s151 = sphi 0, %s135
    $region4: #{tpu_custom_call.1} parent=1 // loop_header_branch
      %21 = sbr.rel (%p19) target = $region8
    $region5: #{tpu_custom_call.1} parent=1 // loop_body
      %s23 = ssub.s32 %s18, 1
      %s24 = ssub.s32 %s18, 2
      %s34 = sadd.s32 1, %s27
      %p35 = scmp.ge.s32.totalorder %s34, 2
      %s36 = scalar_select %p35, 0, %s34
      %s37 = sadd.s32 1, %s26
      %s38 = scalar_select %p35, %s37, %s26
      %p39 = scmp.ge.s32.totalorder %s38, 2
      %s40 = scalar_select %p39, 0, %s38
      %s41 = sadd.s32 1, %s25
      %s42 = scalar_select %p39, %s41, %s25
      %p43 = scmp.ge.s32.totalorder %s42, 2
      %s44 = scalar_select %p43, 0, %s42
      %s45 = ssub.s32 %s25, %s44
      %s46 = ssub.s32 %s27, %s36
      %s47 = sor.u32 %s45, %s46
      %p48 = scmp.eq.s32.totalorder %s47, 0
      %s50 = sadd.s32 %s49, 1
      %s51 = scalar_select %p48, %s49, %s50
      %p54 = pneg %p48
      %p55 = scmp.eq.s32.totalorder %s18, 7
      %p56 = por %p54, %p55
      %p57 = scmp.ne.s32.totalorder %s49, %s52
      %p58 = scmp.eq.s32.totalorder %s18, 0
      %p59 = por %p57, %p58
      %p60 = scmp.ne.s32.totalorder %s49, %s52
      %p61 = scmp.eq.s32.totalorder %s23, 7
      %p62 = por %p60, %p61
      %p63 = scmp.ne.s32.totalorder %s52, %s53
      %p64 = scmp.eq.s32.totalorder %s23, 0
      %p65 = por %p63, %p64
      %p66 = scmp.ne.s32.totalorder %s52, %s53
      %p67 = scmp.eq.s32.totalorder %s24, 7
      %p68 = por %p66, %p67
      %p70 = scmp.ne.s32.totalorder %s53, %s69
      %p71 = scmp.eq.s32.totalorder %s24, 0
      %p72 = por %p70, %p71
      %s73 = ssub.s32 %s27, %s36
      %s74 = ssub.s32 %s26, %s40
      %s75 = sor.u32 %s73, %s74
      %p76 = scmp.eq.s32.totalorder %s75, 0
      %s78 = sadd.s32 %s77, 1
      %s79 = scalar_select %p76, %s77, %s78
      %p82 = pneg %p76
      %p83 = scmp.eq.s32.totalorder %s18, 7
      %p84 = por %p82, %p83
      %p85 = scmp.ne.s32.totalorder %s77, %s80
      %p86 = scmp.eq.s32.totalorder %s18, 0
      %p87 = por %p85, %p86
      %p88 = scmp.ne.s32.totalorder %s77, %s80
      %p89 = scmp.eq.s32.totalorder %s23, 7
      %p90 = por %p88, %p89
      %p91 = scmp.ne.s32.totalorder %s80, %s81
      %p92 = scmp.eq.s32.totalorder %s23, 0
      %p93 = por %p91, %p92
      %p94 = scmp.ne.s32.totalorder %s80, %s81
      %p95 = scmp.eq.s32.totalorder %s24, 7
      %p96 = por %p94, %p95
      %p98 = scmp.ne.s32.totalorder %s81, %s97
      %p99 = scmp.eq.s32.totalorder %s24, 0
      %p100 = por %p98, %p99
      %s101 = ssub.s32 %s26, %s40
      %p102 = scmp.eq.s32.totalorder %s101, 0
      %s104 = sadd.s32 %s103, 1
      %s105 = scalar_select %p102, %s103, %s104
      %p108 = pneg %p102
      %p109 = scmp.eq.s32.totalorder %s18, 7
      %p110 = por %p108, %p109
      %p111 = scmp.ne.s32.totalorder %s103, %s106
      %p112 = scmp.eq.s32.totalorder %s18, 0
      %p113 = por %p111, %p112
      %p114 = scmp.ne.s32.totalorder %s103, %s106
      %p115 = scmp.eq.s32.totalorder %s23, 7
      %p116 = por %p114, %p115
      %p117 = scmp.ne.s32.totalorder %s106, %s107
      %p118 = scmp.eq.s32.totalorder %s23, 0
      %p119 = por %p117, %p118
      %p120 = scmp.ne.s32.totalorder %s106, %s107
      %p121 = scmp.eq.s32.totalorder %s24, 7
      %p122 = por %p120, %p121
      %p124 = scmp.ne.s32.totalorder %s107, %s123
      %p125 = scmp.eq.s32.totalorder %s24, 0
      %p126 = por %p124, %p125
      %s127 = ssub.s32 %s25, %s44
      %s128 = ssub.s32 %s26, %s40
      %s129 = sor.u32 %s127, %s128
      %p130 = scmp.eq.s32.totalorder %s129, 0
      %s132 = sadd.s32 %s131, 1
      %s133 = scalar_select %p130, %s131, %s132
      %p136 = pneg %p130
      %p137 = scmp.eq.s32.totalorder %s18, 7
      %p138 = por %p136, %p137
      %p139 = scmp.ne.s32.totalorder %s131, %s134
      %p140 = scmp.eq.s32.totalorder %s18, 0
      %p141 = por %p139, %p140
      %p142 = scmp.ne.s32.totalorder %s131, %s134
      %p143 = scmp.eq.s32.totalorder %s23, 7
      %p144 = por %p142, %p143
      %p145 = scmp.ne.s32.totalorder %s134, %s135
      %p146 = scmp.eq.s32.totalorder %s23, 0
      %p147 = por %p145, %p146
      %p148 = scmp.ne.s32.totalorder %s134, %s135
      %p149 = scmp.eq.s32.totalorder %s24, 7
      %p150 = por %p148, %p149
      %p152 = scmp.ne.s32.totalorder %s135, %s151
      %p153 = scmp.eq.s32.totalorder %s24, 0
      %p154 = por %p152, %p153
      %p155 = scmp.le.s32.totalorder 1, %s18
      %p156 = scmp.lt.s32.totalorder %s18, 9
      %p157 = pnand %p155, %p156
      %p158 = pneg %p157
      // Predicated region
      $region9: #{tpu_custom_call.1} parent=5 // pred_check
        _
      $region10: #{tpu_custom_call.1} parent=5 // pred_check_branch
        %160 = sbr.rel (%p157) target = $region12
      $region11: #{tpu_custom_call.1} parent=5 // pred_region
        %s161 = ssub.s32 %s18, 1
      $region12: #{tpu_custom_call.1} parent=5 // pred_fallthru
        _
      %p162 = scmp.lt.s32.totalorder %s18, 8
      // Predicated region
      $region13: #{tpu_custom_call.1} parent=5 // pred_check
        %p163 = pneg %p162
      $region14: #{tpu_custom_call.1} parent=5 // pred_check_branch
        %165 = sbr.rel (%p163) target = $region16
      $region15: #{tpu_custom_call.1} parent=5 // pred_region
        // Predicated region
        $region17: #{tpu_custom_call.1} parent=15 // pred_check
          %p166 = pneg %p59
        $region18: #{tpu_custom_call.1} parent=15 // pred_check_branch
          %168 = sbr.rel (%p166) target = $region20
        $region19: #{tpu_custom_call.1} parent=15 // pred_region
          %s169 = sand.u32 %s49, 1
          %s170 = scalar_lea.sflag [#allocation3], %s169
          %s171 = sand.u32 %s49, 1
          %s172 = smul.addr %s171, 8
          %s173 = scalar_lea.vmem [#allocation2], %s172
          %s175 = ssub.s32 128, 128
          %176 = vsyncadd %s170, %s175
          %s177 = smul.addr %s25, 2
          %s178 = sadd.s32 %s27, %s177
          %s179 = smul.addr %s178, 128
          %s180 = scalar_lea.hbm %s0, %s179
          %s182 = sshll.u32 %s173, 4
          %s183 = int_to_ptr.vmem [resolvable:$true] %s182
          %185 = dma.hbm_to_vmem [thread:$0]  %s180, 128, %s183, %s170
        $region20: #{tpu_custom_call.1} parent=15 // pred_fallthru
          _
        // Predicated region
        $region21: #{tpu_custom_call.1} parent=15 // pred_check
          %p186 = pneg %p87
        $region22: #{tpu_custom_call.1} parent=15 // pred_check_branch
          %188 = sbr.rel (%p186) target = $region24
        $region23: #{tpu_custom_call.1} parent=15 // pred_region
          %s189 = sand.u32 %s77, 1
          %s190 = scalar_lea.sflag [#allocation6], %s189
          %s191 = sand.u32 %s77, 1
          %s192 = smul.addr %s191, 128
          %s193 = scalar_lea.vmem [#allocation5], %s192
          %s194 = smul.u32 16, %s27
          %s196 = ssub.s32 2048, 2048
          %197 = vsyncadd %s190, %s196
          %s198 = smul.addr %s194, 2
          %s199 = sadd.s32 %s26, %s198
          %s200 = smul.addr %s199, 128
          %s201 = scalar_lea.hbm %s1, %s200
          %s202 = sshll.u32 %s193, 4
          %s203 = int_to_ptr.vmem [resolvable:$true] %s202
          %208 = dma.hbm_to_vmem [thread:$0]  %s201, 2048, %s203, %s190, 256, 128, 8
        $region24: #{tpu_custom_call.1} parent=15 // pred_fallthru
          _
        // Predicated region
        $region25: #{tpu_custom_call.1} parent=15 // pred_check
          %p209 = pneg %p113
        $region26: #{tpu_custom_call.1} parent=15 // pred_check_branch
          %211 = sbr.rel (%p209) target = $region28
        $region27: #{tpu_custom_call.1} parent=15 // pred_region
          %p212 = scmp.lt.s32.totalorder %s26, 1
          %s213 = scalar_select %p212, %s26, 1
          %s214 = scalar_lea.vmem %s2, %s213
        $region28: #{tpu_custom_call.1} parent=15 // pred_fallthru
          _
      $region16: #{tpu_custom_call.1} parent=5 // pred_fallthru
        _
      %p215 = scmp.le.s32.totalorder 1, %s18
      %p216 = scmp.lt.s32.totalorder %s18, 9
      %p217 = pnand %p215, %p216
      %p218 = pneg %p217
      // Predicated region
      $region29: #{tpu_custom_call.1} parent=5 // pred_check
        _
      $region30: #{tpu_custom_call.1} parent=5 // pred_check_branch
        %220 = sbr.rel (%p217) target = $region32
      $region31: #{tpu_custom_call.1} parent=5 // pred_region
        %s221 = ssub.s32 %s18, 1
        %s222 = sand.u32 %s52, 1
        %s223 = scalar_lea.sflag [#allocation3], %s222
        %s224 = sand.u32 %s52, 1
        %s225 = smul.addr %s224, 8
        %s226 = scalar_lea.vmem [#allocation2], %s225
        // Predicated region
        $region33: #{tpu_custom_call.1} parent=31 // pred_check
          %p227 = pneg %p65
        $region34: #{tpu_custom_call.1} parent=31 // pred_check_branch
          %229 = sbr.rel (%p227) target = $region36
        $region35: #{tpu_custom_call.1} parent=31 // pred_region
          %230 = dma.done %s223, 128
        $region36: #{tpu_custom_call.1} parent=31 // pred_fallthru
          _
        %s231 = sand.u32 %s80, 1
        %s232 = scalar_lea.sflag [#allocation6], %s231
        %s233 = sand.u32 %s80, 1
        %s234 = smul.addr %s233, 128
        %s235 = scalar_lea.vmem [#allocation5], %s234
        // Predicated region
        $region37: #{tpu_custom_call.1} parent=31 // pred_check
          %p236 = pneg %p93
        $region38: #{tpu_custom_call.1} parent=31 // pred_check_branch
          %238 = sbr.rel (%p236) target = $region40
        $region39: #{tpu_custom_call.1} parent=31 // pred_region
          %239 = dma.done %s232, 2048
        $region40: #{tpu_custom_call.1} parent=31 // pred_fallthru
          _
        %s240 = sand.u32 %s52, 1
        %s241 = scalar_lea.sflag [#allocation3], %s240
        %s242 = sand.u32 %s52, 1
        %s243 = smul.addr %s242, 8
        %s244 = scalar_lea.vmem [#allocation2], %s243
        %p245 = pneg %p65
        %p246 = pneg %p62
        %s247 = sand.u32 %s80, 1
        %s248 = scalar_lea.sflag [#allocation6], %s247
        %s249 = sand.u32 %s80, 1
        %s250 = smul.addr %s249, 128
        %s251 = scalar_lea.vmem [#allocation5], %s250
        %p252 = pneg %p93
        %p253 = pneg %p90
        %p254 = scmp.lt.s32.totalorder %s29, 1
        %s255 = scalar_select %p254, %s29, 1
        %s256 = scalar_lea.vmem %s2, %s255
        %p257 = pneg %p119
        %p258 = pneg %p116
        %p259 = pneg %p147
        %p260 = pneg %p144
        %s261 = sand.u32 %s134, 1
        %s262 = scalar_lea.sflag [#allocation4], %s261
        %s263 = sand.u32 %s134, 1
        %s264 = smul.addr %s263, 8
        %s265 = scalar_lea.vmem [#allocation7], %s264
        %s266 = smul.u32 16, %s30
        %p267 = scmp.lt.s32.totalorder %s29, 1
        %s268 = scalar_select %p267, %s29, 1
        %s269 = scalar_lea.vmem %s2, %s268
        %v270 = vld [vmem:[%s226] sm:$0xff]
        %v271 = vld [vmem:[%s235] sm:$0xff]
        %v272 = vld [vmem:[%s235 + $0x8] sm:$0xff]
        %v273 = vld [vmem:[%s235 + $0x10] sm:$0xff]
        %v274 = vld [vmem:[%s235 + $0x18] sm:$0xff]
        %v275 = vld [vmem:[%s235 + $0x20] sm:$0xff]
        %v276 = vld [vmem:[%s235 + $0x28] sm:$0xff]
        %v277 = vld [vmem:[%s235 + $0x30] sm:$0xff]
        %v278 = vld [vmem:[%s235 + $0x38] sm:$0xff]
        %v279 = vld [vmem:[%s235 + $0x40] sm:$0xff]
        %v280 = vld [vmem:[%s235 + $0x48] sm:$0xff]
        %v281 = vld [vmem:[%s235 + $0x50] sm:$0xff]
        %v282 = vld [vmem:[%s235 + $0x58] sm:$0xff]
        %v283 = vld [vmem:[%s235 + $0x60] sm:$0xff]
        %v284 = vld [vmem:[%s235 + $0x68] sm:$0xff]
        %v285 = vld [vmem:[%s235 + $0x70] sm:$0xff]
        %v286 = vld [vmem:[%s235 + $0x78] sm:$0xff]
        %287 = vmatprep.subr.mxu0 0.0
        %288 = vmatpush1.msra.mxu0 %v271
        %289 = vmatprep.subr.mxu0 0.0
        %290 = vmatpush1.msra.mxu0 %v272
        %291 = vmatprep.subr.mxu0 0.0
        %292 = vmatpush1.msra.mxu0 %v273
        %293 = vmatprep.subr.mxu0 0.0
        %294 = vmatpush1.msra.mxu0 %v274
        %295 = vmatprep.subr.mxu0 0.0
        %296 = vmatpush1.msra.mxu0 %v275
        %297 = vmatprep.subr.mxu0 0.0
        %298 = vmatpush1.msra.mxu0 %v276
        %299 = vmatprep.subr.mxu0 0.0
        %300 = vmatpush1.msra.mxu0 %v277
        %301 = vmatprep.subr.mxu0 0.0
        %302 = vmatpush1.msra.mxu0 %v278
        %303 = vmatprep.subr.mxu0 0.0
        %304 = vmatpush1.msra.mxu0 %v279
        %305 = vmatprep.subr.mxu0 0.0
        %306 = vmatpush1.msra.mxu0 %v280
        %307 = vmatprep.subr.mxu0 0.0
        %308 = vmatpush1.msra.mxu0 %v281
        %309 = vmatprep.subr.mxu0 0.0
        %310 = vmatpush1.msra.mxu0 %v282
        %311 = vmatprep.subr.mxu0 0.0
        %312 = vmatpush1.msra.mxu0 %v283
        %313 = vmatprep.subr.mxu0 0.0
        %314 = vmatpush1.msra.mxu0 %v284
        %315 = vmatprep.subr.mxu0 0.0
        %316 = vmatpush1.msra.mxu0 %v285
        %317 = vmatprep.subr.mxu0 0.0
        %318 = vmatpush1.msra.mxu0 %v286
        %319 = vmatprep.subr.mxu0 0.0
        %320 = vmatpush1.msra.mxu0 0.0
        %321 = vmatprep.subr.mxu0 0.0
        %322 = vmatpush1.msra.mxu0 0.0
        %323 = vmatprep.subr.mxu0 0.0
        %324 = vmatpush1.msra.mxu0 0.0
        %325 = vmatprep.subr.mxu0 0.0
        %326 = vmatpush1.msra.mxu0 0.0
        %327 = vmatprep.subr.mxu0 0.0
        %328 = vmatpush1.msra.mxu0 0.0
        %329 = vmatprep.subr.mxu0 0.0
        %330 = vmatpush1.msra.mxu0 0.0
        %331 = vmatprep.subr.mxu0 0.0
        %332 = vmatpush1.msra.mxu0 0.0
        %333 = vmatprep.subr.mxu0 0.0
        %334 = vmatpush1.msra.mxu0 0.0
        %335 = vmatprep.subr.mxu0 0.0
        %336 = vmatpush1.msra.mxu0 0.0
        %337 = vmatprep.subr.mxu0 0.0
        %338 = vmatpush1.msra.mxu0 0.0
        %339 = vmatprep.subr.mxu0 0.0
        %340 = vmatpush1.msra.mxu0 0.0
        %341 = vmatprep.subr.mxu0 0.0
        %342 = vmatpush1.msra.mxu0 0.0
        %343 = vmatprep.subr.mxu0 0.0
        %344 = vmatpush1.msra.mxu0 0.0
        %345 = vmatprep.subr.mxu0 0.0
        %346 = vmatpush1.msra.mxu0 0.0
        %347 = vmatprep.subr.mxu0 0.0
        %348 = vmatpush1.msra.mxu0 0.0
        %349 = vmatprep.subr.mxu0 0.0
        %350 = vmatpush1.msra.mxu0 0.0
        %351 = vmatprep.mubr.f32.mxu0 0.0
        %352 = vmatmul.mubr.f32.gmra.mrb[0].mxu0 %v270
        %v353 = vpop.f32.mrb[0].mxu0
        %v354 = vadd.f32 0.0, %v353
        %v355 = vpop.f32.mrb[0].mxu0
        %356 = vdwg.mxu0
        %p357 = scmp.eq.s32.totalorder %s30, 0
        // Predicated region
        $region41: #{tpu_custom_call.1} parent=31 // pred_check
          %p358 = pneg %p357
        $region42: #{tpu_custom_call.1} parent=31 // pred_check_branch
          %360 = sbr.rel (%p358) target = $region44
        $region43: #{tpu_custom_call.1} parent=31 // pred_region
          %v361 = vld [vmem:[%s269] sm:$0x1]
          %v363 = vlaneseq
          %v364 = vshrl.u32 %v363, 7
          %v365 = vsub.s32 0, %v364
          %v366 = vrot.slane %v361, %v365
          %368 = vst [vmem:[%s265] sm:$0xff] %v366
        $region44: #{tpu_custom_call.1} parent=31 // pred_fallthru
          _
        %v369 = vld [vmem:[%s265] sm:$0xff]
        %v370 = vadd.f32 %v369, %v354
        %371 = vst [vmem:[%s265] sm:$0xff] %v370
        %s372 = sand.u32 %s134, 1
        %s373 = scalar_lea.sflag [#allocation4], %s372
        %s374 = sand.u32 %s134, 1
        %s375 = smul.addr %s374, 8
        %s376 = scalar_lea.vmem [#allocation7], %s375
        // Predicated region
        $region45: #{tpu_custom_call.1} parent=31 // pred_check
          %p377 = pneg %p144
        $region46: #{tpu_custom_call.1} parent=31 // pred_check_branch
          %379 = sbr.rel (%p377) target = $region48
        $region47: #{tpu_custom_call.1} parent=31 // pred_region
          %s381 = ssub.s32 128, 128
          %382 = vsyncadd %s373, %s381
          %s383 = smul.addr %s28, 2
          %s384 = sadd.s32 %s29, %s383
          %s385 = smul.addr %s384, 128
          %s386 = scalar_lea.hbm %s3, %s385
          %s388 = sshll.u32 %s376, 4
          %s389 = int_to_ptr.vmem [resolvable:$true] %s388
          %391 = dma.vmem_to_hbm [thread:$0]  %s389, 128, %s386, %s373
        $region48: #{tpu_custom_call.1} parent=31 // pred_fallthru
          _
      $region32: #{tpu_custom_call.1} parent=5 // pred_fallthru
        _
      %p392 = scmp.le.s32.totalorder 2, %s18
      // Predicated region
      $region49: #{tpu_custom_call.1} parent=5 // pred_check
        %p393 = pneg %p392
      $region50: #{tpu_custom_call.1} parent=5 // pred_check_branch
        %395 = sbr.rel (%p393) target = $region52
      $region51: #{tpu_custom_call.1} parent=5 // pred_region
        %s396 = ssub.s32 %s18, 2
        // Predicated region
        $region53: #{tpu_custom_call.1} parent=51 // pred_check
          %p397 = pneg %p150
        $region54: #{tpu_custom_call.1} parent=51 // pred_check_branch
          %399 = sbr.rel (%p397) target = $region56
        $region55: #{tpu_custom_call.1} parent=51 // pred_region
          %s400 = sand.u32 %s135, 1
          %s401 = scalar_lea.sflag [#allocation4], %s400
          %s402 = sand.u32 %s135, 1
          %s403 = smul.addr %s402, 8
          %s404 = scalar_lea.vmem [#allocation7], %s403
          %405 = dma.done %s401, 128
        $region56: #{tpu_custom_call.1} parent=51 // pred_fallthru
          _
      $region52: #{tpu_custom_call.1} parent=5 // pred_fallthru
        _
    $region6: #{tpu_custom_call.1} parent=1 // loop_footer
      %s22 = sadd.s32 1, %s18
    $region7: #{tpu_custom_call.1} parent=1 // loop_footer_branch
      %17 = sbr.rel target = $region3
    $region8: #{tpu_custom_call.1} parent=1 // loop_exit
      _
    %406 = vsyncpa [#allocation3], 1
    %s407 = scalar_lea.sflag [#allocation3], 1
    %408 = vsyncpa %s407, 1
    %409 = vsyncpa [#allocation6], 1
    %s410 = scalar_lea.sflag [#allocation6], 1
    %411 = vsyncpa %s410, 1
    %412 = vsyncpa [#allocation4], 1
    %s413 = scalar_lea.sflag [#allocation4], 1
    %414 = vsyncpa %s413, 1

</llo_original>
